<compile_context>
chip_gen: v7x
topology: tpu7x:2x2x1
jax: 0.10.0
libtpu: 0.0.40
codegen_flags: <defaults>
</compile_context>

<pallas_src>
import functools
import math

import jax
import jax.numpy as jnp
from jax.experimental import pallas as pl
from jax.experimental.pallas import tpu as pltpu


# ---------------------------------------------------------------------------
# Shared helpers (usable both inside the kernel and in the pure-JAX reference).
# ---------------------------------------------------------------------------
def _gelu_tanh(x):
    c = math.sqrt(2.0 / math.pi)
    return 0.5 * x * (1.0 + jnp.tanh(c * (x + 0.044715 * x * x * x)))


# ---------------------------------------------------------------------------
# Pallas kernel: one (batch, time-tile) step of the fused conv block.
# ---------------------------------------------------------------------------
def _emb_conv_kernel(x_ref, w1_ref, b1_ref, w2_ref, b2_ref, o_ref, *, TL, K, C, H, E):
    # x_ref : (1, Tp, C)   padded time series for this batch element (Tp = T_pad + K - 1)
    # w1_ref: (K, H)       conv1 weights with BN1 folded in
    # b1_ref: (1, H)       conv1 bias with BN1 folded in
    # w2_ref: (C, H, E)    conv2 weights with BN2 folded in
    # b2_ref: (1, E)       conv2 bias with BN2 folded in
    # o_ref : (1, TL, E)   output tile (time rows [l*TL, l*TL+TL))
    l = pl.program_id(1)
    t0 = pl.multiple_of(l * TL, TL)

    # --- Conv1 (time-only kernel, single input channel) + folded BN1 + GELU ---
    hidden = jnp.zeros((TL, C, H), jnp.float32)
    for k in range(K):  # K is a small static constant -> unrolled
        xk = x_ref[0, pl.ds(t0 + k, TL), :]                      # (TL, C)
        hidden = hidden + xk[:, :, None] * w1_ref[k, :][None, None, :]
    g = _gelu_tanh(hidden + b1_ref[0, :][None, None, :])         # (TL, C, H)

    # --- Conv2 (kernel spans all C input channels) + folded BN2 + GELU ---
    acc = jnp.zeros((TL, E), jnp.float32)
    for c in range(C):  # C is a small static constant -> unrolled MXU matmuls
        acc = acc + jnp.dot(g[:, c, :], w2_ref[c],
                            preferred_element_type=jnp.float32)  # (TL, E)
    o_ref[0, :, :] = _gelu_tanh(acc + b2_ref[0, :][None, :]).astype(o_ref.dtype)


# ---------------------------------------------------------------------------
# Wrapper: BN folding, padding, tiling, pallas_call.
# ---------------------------------------------------------------------------
def emb_conv_block_forward(x, params, *, eps=1e-5):
    """x: (B, 1, T, C) float32 -> (B, 1, T, E) float32 (matches the final permute)."""
    B, one, T, C = x.shape
    assert one == 1, "EmbConvBlock expects input shaped (B, 1, T, in_channel)"
    H, _, K, _ = params["w1"].shape
    E = params["w2"].shape[0]
    assert params["w2"].shape == (E, H, 1, C)

    # Fold eval-mode BatchNorm into the conv weights/biases (plain JAX glue).
    s1 = params["gamma1"] / jnp.sqrt(params["var1"] + eps)                        # (H,)
    w1f = (params["w1"][:, 0, :, 0] * s1[:, None]).T                              # (K, H)
    b1f = ((params["b1"] - params["mean1"]) * s1 + params["beta1"])[None, :]      # (1, H)
    s2 = params["gamma2"] / jnp.sqrt(params["var2"] + eps)                        # (E,)
    w2f = jnp.transpose(params["w2"][:, :, 0, :] * s2[:, None, None], (2, 1, 0))  # (C, H, E)
    b2f = ((params["b2"] - params["mean2"]) * s2 + params["beta2"])[None, :]      # (1, E)

    # Time tiling + 'same' padding (PyTorch pads left = (K-1)//2, rest on the right).
    TL = 128 if T >= 128 else 8
    n_t = pl.cdiv(T, TL)
    T_pad = n_t * TL
    left = (K - 1) // 2
    Tp = T_pad + K - 1
    right = Tp - left - T
    xp = jnp.pad(x[:, 0, :, :], ((0, 0), (left, right), (0, 0)))                  # (B, Tp, C)

    kernel = functools.partial(_emb_conv_kernel, TL=TL, K=K, C=C, H=H, E=E)

    # VMEM budget (tiles + in-kernel (TL, C, H) intermediate, generous headroom).
    tile_bytes = 4 * (Tp * C + K * H + H + C * H * E + E + TL * E + TL * C * H)
    vmem_limit = int(min(64 * 1024 * 1024, max(8 * 1024 * 1024, 8 * tile_bytes)))

    flops = 2 * B * T_pad * C * H * (K + E)
    transcendentals = B * T_pad * (C * H + E)          # one tanh per GELU element
    bytes_accessed = 4 * (B * Tp * C + K * H + H + C * H * E + E + B * T_pad * E)

    out = pl.pallas_call(
        kernel,
        out_shape=jax.ShapeDtypeStruct((B, T_pad, E), x.dtype),
        grid_spec=pltpu.PrefetchScalarGridSpec(
            num_scalar_prefetch=0,
            grid=(B, n_t),
            in_specs=[
                # x is tiny (T*C floats); full padded time per batch element. Its
                # block index is constant over the inner time axis, so it is DMA'd
                # only once per batch element.
                pl.BlockSpec((1, Tp, C), lambda b, l: (b, 0, 0)),
                pl.BlockSpec((K, H), lambda b, l: (0, 0)),       # conv1 weights
                pl.BlockSpec((1, H), lambda b, l: (0, 0)),       # conv1 bias
                pl.BlockSpec((C, H, E), lambda b, l: (0, 0, 0)), # conv2 weights
                pl.BlockSpec((1, E), lambda b, l: (0, 0)),       # conv2 bias
            ],
            out_specs=pl.BlockSpec((1, TL, E), lambda b, l: (b, l, 0)),
        ),
        compiler_params=pltpu.CompilerParams(
            dimension_semantics=("parallel", "parallel"),
            vmem_limit_bytes=vmem_limit,
        ),
        cost_estimate=pl.CostEstimate(
            flops=int(flops),
            transcendentals=int(transcendentals),
            bytes_accessed=int(bytes_accessed),
        ),
    )(xp, w1f, b1f, w2f, b2f)

    # Drop time padding; final permute(0,3,2,1) of (B,E,T,1) == (B,1,T,E).
    return out[:, :T, :][:, None, :, :]


# ---------------------------------------------------------------------------
# Pure-JAX reference (unfolded params, explicit BN) for the correctness check.
# ---------------------------------------------------------------------------
def ref_forward(x, p, eps=1e-5):
    B, _, T, C = x.shape
    w1 = p["w1"][:, 0, :, 0]                       # (H, K)
    H, K = w1.shape
    left = (K - 1) // 2
    right = (K - 1) - left
    xp = jnp.pad(x[:, 0], ((0, 0), (left, right), (0, 0)))        # (B, T+K-1, C)
    y1 = p["b1"][None, :, None, None] + sum(
        w1[None, :, k, None, None] * xp[:, None, k:k + T, :] for k in range(K))
    s1 = p["gamma1"] / jnp.sqrt(p["var1"] + eps)
    y1 = (y1 - p["mean1"][None, :, None, None]) * s1[None, :, None, None] \
         + p["beta1"][None, :, None, None]
    g1 = _gelu_tanh(y1)                                            # (B, H, T, C)
    y2 = jnp.einsum("bhtc,ehc->bet", g1, p["w2"][:, :, 0, :]) + p["b2"][None, :, None]
    s2 = p["gamma2"] / jnp.sqrt(p["var2"] + eps)
    y2 = (y2 - p["mean2"][None, :, None]) * s2[None, :, None] + p["beta2"][None, :, None]
    g2 = _gelu_tanh(y2)                                            # (B, E, T)
    return jnp.transpose(g2, (0, 2, 1))[:, None, :, :]             # (B, 1, T, E)


def init_params(key, in_channel, T_kernel_size, emb_size, hidden_size):
    H, E, K, C = hidden_size, emb_size, T_kernel_size, in_channel
    ks = jax.random.split(key, 12)
    p = {
        "w1": jax.random.normal(ks[0], (H, 1, K, 1), jnp.float32) / math.sqrt(K),
        "b1": 0.1 * jax.random.normal(ks[1], (H,), jnp.float32),
        "gamma1": 1.0 + 0.1 * jax.random.normal(ks[2], (H,), jnp.float32),
        "beta1": 0.1 * jax.random.normal(ks[3], (H,), jnp.float32),
        "mean1": 0.1 * jax.random.normal(ks[4], (H,), jnp.float32),
        "var1": jax.random.uniform(ks[5], (H,), jnp.float32, 0.5, 1.5),
        "w2": jax.random.normal(ks[6], (E, H, 1, C), jnp.float32) / math.sqrt(H * C),
        "b2": 0.1 * jax.random.normal(ks[7], (E,), jnp.float32),
        "gamma2": 1.0 + 0.1 * jax.random.normal(ks[8], (E,), jnp.float32),
        "beta2": 0.1 * jax.random.normal(ks[9], (E,), jnp.float32),
        "mean2": 0.1 * jax.random.normal(ks[10], (E,), jnp.float32),
        "var2": jax.random.uniform(ks[11], (E,), jnp.float32, 0.5, 1.5),
    }
    return p


if __name__ == "__main__":
    # Small shapes consistent with the module: x is (B, 1, T, in_channel).
    batch, in_channel, seq_len = 2, 4, 16
    T_kernel_size, emb_size, hidden_size = 5, 32, 128

    key = jax.random.PRNGKey(0)
    kx, kp = jax.random.split(key)
    x = jax.random.normal(kx, (batch, 1, seq_len, in_channel), dtype=jnp.float32)
    params = init_params(kp, in_channel, T_kernel_size, emb_size, hidden_size)

    out = emb_conv_block_forward(x, params)
    out = jax.block_until_ready(out)

    ref = ref_forward(x, params)
    assert out.shape == (batch, 1, seq_len, emb_size), out.shape
    max_err = float(jnp.max(jnp.abs(out - ref)))
    assert jnp.allclose(out, ref, atol=2e-3, rtol=2e-3), f"mismatch, max abs err={max_err}"

    print("KERNEL_OK")
</pallas_src>

<mosaic_0001>
module attributes {stable_mosaic.version = 11 : i64} {
  func.func @_emb_conv_kernel(%arg0: i32, %arg1: i32, %arg2: memref<1x20x4xf32, #tpu.memory_space<vmem>>, %arg3: memref<5x128xf32, #tpu.memory_space<vmem>>, %arg4: memref<1x128xf32, #tpu.memory_space<vmem>>, %arg5: memref<4x128x32xf32, #tpu.memory_space<vmem>>, %arg6: memref<1x32xf32, #tpu.memory_space<vmem>>, %arg7: memref<1x8x32xf32, #tpu.memory_space<vmem>>) attributes {dimension_semantics = [#tpu.dimension_semantics<parallel>, #tpu.dimension_semantics<parallel>], iteration_bounds = array<i64: 2, 2>, scalar_prefetch = 0 : i64, scratch_operands = 0 : i64, tpu.core_type = #tpu.core_type<tc>, window_params = [{transform_indices = @transform_0, window_bounds = array<i64: 1, 20, 4>}, {pipeline_mode = #tpu.pipeline_mode<synchronous>, transform_indices = @transform_1, window_bounds = array<i64: 5, 128>}, {pipeline_mode = #tpu.pipeline_mode<synchronous>, transform_indices = @transform_2, window_bounds = array<i64: 1, 128>}, {pipeline_mode = #tpu.pipeline_mode<synchronous>, transform_indices = @transform_3, window_bounds = array<i64: 4, 128, 32>}, {pipeline_mode = #tpu.pipeline_mode<synchronous>, transform_indices = @transform_4, window_bounds = array<i64: 1, 32>}, {transform_indices = @transform_5, window_bounds = array<i64: 1, 8, 32>}]} {
    %c8_i32 = arith.constant 8 : i32
    %0 = arith.muli %arg1, %c8_i32 : i32
    %1 = tpu.assume_multiple %0, 8 : i32
    %cst = arith.constant 0.000000e+00 : f32
    %2 = vector.broadcast %cst : f32 to vector<8x4x128xf32>
    %c0_i32 = arith.constant 0 : i32
    %3 = arith.addi %1, %c0_i32 : i32
    %c0 = arith.constant 0 : index
    %4 = arith.index_cast %3 : i32 to index
    %c0_0 = arith.constant 0 : index
    %5 = vector.load %arg2[%c0, %4, %c0_0] : memref<1x20x4xf32, #tpu.memory_space<vmem>>, vector<1x8x4xf32>
    %6 = vector.shape_cast %5 : vector<1x8x4xf32> to vector<8x4xf32>
    %7 = vector.shape_cast %6 : vector<8x4xf32> to vector<8x4x1xf32>
    %c0_1 = arith.constant 0 : index
    %c0_2 = arith.constant 0 : index
    %8 = vector.load %arg3[%c0_1, %c0_2] : memref<5x128xf32, #tpu.memory_space<vmem>>, vector<1x128xf32>
    %9 = vector.shape_cast %8 : vector<1x128xf32> to vector<128xf32>
    %10 = vector.shape_cast %9 : vector<128xf32> to vector<1x1x128xf32>
    %11 = vector.broadcast %7 : vector<8x4x1xf32> to vector<8x4x128xf32>
    %12 = vector.broadcast %10 : vector<1x1x128xf32> to vector<8x4x128xf32>
    %13 = arith.mulf %11, %12 : vector<8x4x128xf32>
    %14 = arith.addf %2, %13 : vector<8x4x128xf32>
    %c1_i32 = arith.constant 1 : i32
    %15 = arith.addi %1, %c1_i32 : i32
    %c0_3 = arith.constant 0 : index
    %16 = arith.index_cast %15 : i32 to index
    %c0_4 = arith.constant 0 : index
    %17 = vector.load %arg2[%c0_3, %16, %c0_4] : memref<1x20x4xf32, #tpu.memory_space<vmem>>, vector<1x8x4xf32>
    %18 = vector.shape_cast %17 : vector<1x8x4xf32> to vector<8x4xf32>
    %19 = vector.shape_cast %18 : vector<8x4xf32> to vector<8x4x1xf32>
    %c1 = arith.constant 1 : index
    %c0_5 = arith.constant 0 : index
    %20 = vector.load %arg3[%c1, %c0_5] : memref<5x128xf32, #tpu.memory_space<vmem>>, vector<1x128xf32>
    %21 = vector.shape_cast %20 : vector<1x128xf32> to vector<128xf32>
    %22 = vector.shape_cast %21 : vector<128xf32> to vector<1x1x128xf32>
    %23 = vector.broadcast %19 : vector<8x4x1xf32> to vector<8x4x128xf32>
    %24 = vector.broadcast %22 : vector<1x1x128xf32> to vector<8x4x128xf32>
    %25 = arith.mulf %23, %24 : vector<8x4x128xf32>
    %26 = arith.addf %14, %25 : vector<8x4x128xf32>
    %c2_i32 = arith.constant 2 : i32
    %27 = arith.addi %1, %c2_i32 : i32
    %c0_6 = arith.constant 0 : index
    %28 = arith.index_cast %27 : i32 to index
    %c0_7 = arith.constant 0 : index
    %29 = vector.load %arg2[%c0_6, %28, %c0_7] : memref<1x20x4xf32, #tpu.memory_space<vmem>>, vector<1x8x4xf32>
    %30 = vector.shape_cast %29 : vector<1x8x4xf32> to vector<8x4xf32>
    %31 = vector.shape_cast %30 : vector<8x4xf32> to vector<8x4x1xf32>
    %c2 = arith.constant 2 : index
    %c0_8 = arith.constant 0 : index
    %32 = vector.load %arg3[%c2, %c0_8] : memref<5x128xf32, #tpu.memory_space<vmem>>, vector<1x128xf32>
    %33 = vector.shape_cast %32 : vector<1x128xf32> to vector<128xf32>
    %34 = vector.shape_cast %33 : vector<128xf32> to vector<1x1x128xf32>
    %35 = vector.broadcast %31 : vector<8x4x1xf32> to vector<8x4x128xf32>
    %36 = vector.broadcast %34 : vector<1x1x128xf32> to vector<8x4x128xf32>
    %37 = arith.mulf %35, %36 : vector<8x4x128xf32>
    %38 = arith.addf %26, %37 : vector<8x4x128xf32>
    %c3_i32 = arith.constant 3 : i32
    %39 = arith.addi %1, %c3_i32 : i32
    %c0_9 = arith.constant 0 : index
    %40 = arith.index_cast %39 : i32 to index
    %c0_10 = arith.constant 0 : index
    %41 = vector.load %arg2[%c0_9, %40, %c0_10] : memref<1x20x4xf32, #tpu.memory_space<vmem>>, vector<1x8x4xf32>
    %42 = vector.shape_cast %41 : vector<1x8x4xf32> to vector<8x4xf32>
    %43 = vector.shape_cast %42 : vector<8x4xf32> to vector<8x4x1xf32>
    %c3 = arith.constant 3 : index
    %c0_11 = arith.constant 0 : index
    %44 = vector.load %arg3[%c3, %c0_11] : memref<5x128xf32, #tpu.memory_space<vmem>>, vector<1x128xf32>
    %45 = vector.shape_cast %44 : vector<1x128xf32> to vector<128xf32>
    %46 = vector.shape_cast %45 : vector<128xf32> to vector<1x1x128xf32>
    %47 = vector.broadcast %43 : vector<8x4x1xf32> to vector<8x4x128xf32>
    %48 = vector.broadcast %46 : vector<1x1x128xf32> to vector<8x4x128xf32>
    %49 = arith.mulf %47, %48 : vector<8x4x128xf32>
    %50 = arith.addf %38, %49 : vector<8x4x128xf32>
    %c4_i32 = arith.constant 4 : i32
    %51 = arith.addi %1, %c4_i32 : i32
    %c0_12 = arith.constant 0 : index
    %52 = arith.index_cast %51 : i32 to index
    %c0_13 = arith.constant 0 : index
    %53 = vector.load %arg2[%c0_12, %52, %c0_13] : memref<1x20x4xf32, #tpu.memory_space<vmem>>, vector<1x8x4xf32>
    %54 = vector.shape_cast %53 : vector<1x8x4xf32> to vector<8x4xf32>
    %55 = vector.shape_cast %54 : vector<8x4xf32> to vector<8x4x1xf32>
    %c4 = arith.constant 4 : index
    %c0_14 = arith.constant 0 : index
    %56 = vector.load %arg3[%c4, %c0_14] : memref<5x128xf32, #tpu.memory_space<vmem>>, vector<1x128xf32>
    %57 = vector.shape_cast %56 : vector<1x128xf32> to vector<128xf32>
    %58 = vector.shape_cast %57 : vector<128xf32> to vector<1x1x128xf32>
    %59 = vector.broadcast %55 : vector<8x4x1xf32> to vector<8x4x128xf32>
    %60 = vector.broadcast %58 : vector<1x1x128xf32> to vector<8x4x128xf32>
    %61 = arith.mulf %59, %60 : vector<8x4x128xf32>
    %62 = arith.addf %50, %61 : vector<8x4x128xf32>
    %c0_15 = arith.constant 0 : index
    %c0_16 = arith.constant 0 : index
    %63 = vector.load %arg4[%c0_15, %c0_16] : memref<1x128xf32, #tpu.memory_space<vmem>>, vector<1x128xf32>
    %64 = vector.shape_cast %63 : vector<1x128xf32> to vector<128xf32>
    %65 = vector.shape_cast %64 : vector<128xf32> to vector<1x1x128xf32>
    %66 = vector.broadcast %65 : vector<1x1x128xf32> to vector<8x4x128xf32>
    %67 = arith.addf %62, %66 : vector<8x4x128xf32>
    %cst_17 = arith.constant 5.000000e-01 : f32
    %68 = vector.broadcast %cst_17 : f32 to vector<8x4x128xf32>
    %69 = arith.mulf %68, %67 : vector<8x4x128xf32>
    %cst_18 = arith.constant 4.471500e-02 : f32
    %70 = vector.broadcast %cst_18 : f32 to vector<8x4x128xf32>
    %71 = arith.mulf %70, %67 : vector<8x4x128xf32>
    %72 = arith.mulf %71, %67 : vector<8x4x128xf32>
    %73 = arith.mulf %72, %67 : vector<8x4x128xf32>
    %74 = arith.addf %67, %73 : vector<8x4x128xf32>
    %cst_19 = arith.constant 0.797884583 : f32
    %75 = vector.broadcast %cst_19 : f32 to vector<8x4x128xf32>
    %76 = arith.mulf %75, %74 : vector<8x4x128xf32>
    %77 = math.tanh %76 : vector<8x4x128xf32>
    %cst_20 = arith.constant 1.000000e+00 : f32
    %78 = vector.broadcast %cst_20 : f32 to vector<8x4x128xf32>
    %79 = arith.addf %78, %77 : vector<8x4x128xf32>
    %80 = arith.mulf %69, %79 : vector<8x4x128xf32>
    %cst_21 = arith.constant 0.000000e+00 : f32
    %81 = vector.broadcast %cst_21 : f32 to vector<8x32xf32>
    %82 = vector.extract_strided_slice %80 {offsets = [0, 0, 0], sizes = [8, 1, 128], strides = [1, 1, 1]} : vector<8x4x128xf32> to vector<8x1x128xf32>
    %83 = vector.shape_cast %82 : vector<8x1x128xf32> to vector<8x128xf32>
    %c0_22 = arith.constant 0 : index
    %c0_23 = arith.constant 0 : index
    %c0_24 = arith.constant 0 : index
    %84 = vector.load %arg5[%c0_22, %c0_23, %c0_24] : memref<4x128x32xf32, #tpu.memory_space<vmem>>, vector<1x128x32xf32>
    %85 = vector.shape_cast %84 : vector<1x128x32xf32> to vector<128x32xf32>
    %cst_25 = arith.constant dense<0.000000e+00> : vector<8x32xf32>
    %86 = tpu.matmul %83, %85, %cst_25 {dimension_numbers = #tpu.dot_dimension_numbers<[1], [0], [0], [1], [0, 0, 1, 1], [], []>} : vector<8x128xf32>, vector<128x32xf32>, vector<8x32xf32> -> vector<8x32xf32>
    %87 = arith.addf %81, %86 : vector<8x32xf32>
    %88 = vector.extract_strided_slice %80 {offsets = [0, 1, 0], sizes = [8, 1, 128], strides = [1, 1, 1]} : vector<8x4x128xf32> to vector<8x1x128xf32>
    %89 = vector.shape_cast %88 : vector<8x1x128xf32> to vector<8x128xf32>
    %c1_26 = arith.constant 1 : index
    %c0_27 = arith.constant 0 : index
    %c0_28 = arith.constant 0 : index
    %90 = vector.load %arg5[%c1_26, %c0_27, %c0_28] : memref<4x128x32xf32, #tpu.memory_space<vmem>>, vector<1x128x32xf32>
    %91 = vector.shape_cast %90 : vector<1x128x32xf32> to vector<128x32xf32>
    %cst_29 = arith.constant dense<0.000000e+00> : vector<8x32xf32>
    %92 = tpu.matmul %89, %91, %cst_29 {dimension_numbers = #tpu.dot_dimension_numbers<[1], [0], [0], [1], [0, 0, 1, 1], [], []>} : vector<8x128xf32>, vector<128x32xf32>, vector<8x32xf32> -> vector<8x32xf32>
    %93 = arith.addf %87, %92 : vector<8x32xf32>
    %94 = vector.extract_strided_slice %80 {offsets = [0, 2, 0], sizes = [8, 1, 128], strides = [1, 1, 1]} : vector<8x4x128xf32> to vector<8x1x128xf32>
    %95 = vector.shape_cast %94 : vector<8x1x128xf32> to vector<8x128xf32>
    %c2_30 = arith.constant 2 : index
    %c0_31 = arith.constant 0 : index
    %c0_32 = arith.constant 0 : index
    %96 = vector.load %arg5[%c2_30, %c0_31, %c0_32] : memref<4x128x32xf32, #tpu.memory_space<vmem>>, vector<1x128x32xf32>
    %97 = vector.shape_cast %96 : vector<1x128x32xf32> to vector<128x32xf32>
    %cst_33 = arith.constant dense<0.000000e+00> : vector<8x32xf32>
    %98 = tpu.matmul %95, %97, %cst_33 {dimension_numbers = #tpu.dot_dimension_numbers<[1], [0], [0], [1], [0, 0, 1, 1], [], []>} : vector<8x128xf32>, vector<128x32xf32>, vector<8x32xf32> -> vector<8x32xf32>
    %99 = arith.addf %93, %98 : vector<8x32xf32>
    %100 = vector.extract_strided_slice %80 {offsets = [0, 3, 0], sizes = [8, 1, 128], strides = [1, 1, 1]} : vector<8x4x128xf32> to vector<8x1x128xf32>
    %101 = vector.shape_cast %100 : vector<8x1x128xf32> to vector<8x128xf32>
    %c3_34 = arith.constant 3 : index
    %c0_35 = arith.constant 0 : index
    %c0_36 = arith.constant 0 : index
    %102 = vector.load %arg5[%c3_34, %c0_35, %c0_36] : memref<4x128x32xf32, #tpu.memory_space<vmem>>, vector<1x128x32xf32>
    %103 = vector.shape_cast %102 : vector<1x128x32xf32> to vector<128x32xf32>
    %cst_37 = arith.constant dense<0.000000e+00> : vector<8x32xf32>
    %104 = tpu.matmul %101, %103, %cst_37 {dimension_numbers = #tpu.dot_dimension_numbers<[1], [0], [0], [1], [0, 0, 1, 1], [], []>} : vector<8x128xf32>, vector<128x32xf32>, vector<8x32xf32> -> vector<8x32xf32>
    %105 = arith.addf %99, %104 : vector<8x32xf32>
    %c0_38 = arith.constant 0 : index
    %c0_39 = arith.constant 0 : index
    %106 = vector.load %arg6[%c0_38, %c0_39] : memref<1x32xf32, #tpu.memory_space<vmem>>, vector<1x32xf32>
    %107 = vector.shape_cast %106 : vector<1x32xf32> to vector<32xf32>
    %108 = vector.shape_cast %107 : vector<32xf32> to vector<1x32xf32>
    %109 = vector.broadcast %108 : vector<1x32xf32> to vector<8x32xf32>
    %110 = arith.addf %105, %109 : vector<8x32xf32>
    %cst_40 = arith.constant 5.000000e-01 : f32
    %111 = vector.broadcast %cst_40 : f32 to vector<8x32xf32>
    %112 = arith.mulf %111, %110 : vector<8x32xf32>
    %cst_41 = arith.constant 4.471500e-02 : f32
    %113 = vector.broadcast %cst_41 : f32 to vector<8x32xf32>
    %114 = arith.mulf %113, %110 : vector<8x32xf32>
    %115 = arith.mulf %114, %110 : vector<8x32xf32>
    %116 = arith.mulf %115, %110 : vector<8x32xf32>
    %117 = arith.addf %110, %116 : vector<8x32xf32>
    %cst_42 = arith.constant 0.797884583 : f32
    %118 = vector.broadcast %cst_42 : f32 to vector<8x32xf32>
    %119 = arith.mulf %118, %117 : vector<8x32xf32>
    %120 = math.tanh %119 : vector<8x32xf32>
    %cst_43 = arith.constant 1.000000e+00 : f32
    %121 = vector.broadcast %cst_43 : f32 to vector<8x32xf32>
    %122 = arith.addf %121, %120 : vector<8x32xf32>
    %123 = arith.mulf %112, %122 : vector<8x32xf32>
    %c0_44 = arith.constant 0 : index
    %c0_45 = arith.constant 0 : index
    %c0_46 = arith.constant 0 : index
    %124 = vector.load %arg7[%c0_44, %c0_45, %c0_46] : memref<1x8x32xf32, #tpu.memory_space<vmem>>, vector<1x8x32xf32>
    %125 = vector.shape_cast %124 : vector<1x8x32xf32> to vector<8x32xf32>
    %126 = vector.shape_cast %123 : vector<8x32xf32> to vector<1x8x32xf32>
    tpu.vector_store %arg7[%c0_44, %c0_45, %c0_46], %126 {strides = array<i32>} : memref<1x8x32xf32, #tpu.memory_space<vmem>>, vector<1x8x32xf32>,
    return
  }
  func.func @transform_0(%arg0: i32, %arg1: i32) -> (i32, i32, i32) {
    %c0_i32 = arith.constant 0 : i32
    %c0_i32_0 = arith.constant 0 : i32
    %c0_i32_1 = arith.constant 0 : i32
    return %arg0, %c0_i32, %c0_i32_0 : i32, i32, i32
  }
  func.func @transform_1(%arg0: i32, %arg1: i32) -> (i32, i32) {
    %c0_i32 = arith.constant 0 : i32
    %c0_i32_0 = arith.constant 0 : i32
    %c0_i32_1 = arith.constant 0 : i32
    return %c0_i32, %c0_i32_0 : i32, i32
  }
  func.func @transform_2(%arg0: i32, %arg1: i32) -> (i32, i32) {
    %c0_i32 = arith.constant 0 : i32
    %c0_i32_0 = arith.constant 0 : i32
    %c0_i32_1 = arith.constant 0 : i32
    return %c0_i32, %c0_i32_0 : i32, i32
  }
  func.func @transform_3(%arg0: i32, %arg1: i32) -> (i32, i32, i32) {
    %c0_i32 = arith.constant 0 : i32
    %c0_i32_0 = arith.constant 0 : i32
    %c0_i32_1 = arith.constant 0 : i32
    %c0_i32_2 = arith.constant 0 : i32
    return %c0_i32, %c0_i32_0, %c0_i32_1 : i32, i32, i32
  }
  func.func @transform_4(%arg0: i32, %arg1: i32) -> (i32, i32) {
    %c0_i32 = arith.constant 0 : i32
    %c0_i32_0 = arith.constant 0 : i32
    %c0_i32_1 = arith.constant 0 : i32
    return %c0_i32, %c0_i32_0 : i32, i32
  }
  func.func @transform_5(%arg0: i32, %arg1: i32) -> (i32, i32, i32) {
    %c0_i32 = arith.constant 0 : i32
    %c0_i32_0 = arith.constant 0 : i32
    return %arg0, %arg1, %c0_i32 : i32, i32, i32
  }
}

</mosaic_0001>

<llo_original>
// kernel: tpu_custom_call.1
$region0: #{tpu_custom_call.1}
  #allocation0 [shape = 'u32[]', space=smem, size = 0x4, offset = 0x4, fixed_abs, tag = 'smem constant byte address 0x4 - core index']
  #allocation1 [shape = 'u32[144,128]{1,0:T(1,128)}', space=vmem, size = 0x12000, scoped, tag = 'internal scratch']
  %s0 = inlined_call_operand.vmem [shape: f32[2,20,4], index: 0, kind: input, shape index: {}]
  %s1 = inlined_call_operand.vmem [shape: f32[5,128], index: 1, kind: input, shape index: {}]
  %s2 = inlined_call_operand.vmem [shape: f32[1,128], index: 2, kind: input, shape index: {}]
  %s3 = inlined_call_operand.vmem [shape: f32[4,128,32], index: 3, kind: input, shape index: {}]
  %s4 = inlined_call_operand.vmem [shape: f32[1,32], index: 4, kind: input, shape index: {}]
  %s5 = inlined_call_operand.hbm [shape: f32[2,16,32], index: 5, kind: output, shape index: {}]
  %s6 = sld [smem:[#allocation0]]
  $region53: #{tpu_custom_call.1} parent=0
    _
  %s8 = ssub.s32 1, %s6
  %s9 = scalar_select 0, %s8, %s6
  $region1: #{tpu_custom_call.1} parent=0
    #allocation2 [shape = 'u8[8192]{0}', space=vmem, size = 0x2000, scoped, tag = 'output window, operand 0']
    #allocation3 [shape = 's32[2]{0}', space=sflag, size = 0x8, scoped, tag = 'scoped memory for tpu_custom_call.1']
    %10 = vsyncpa [#allocation3], 0
    %s11 = scalar_lea.sflag [#allocation3], 1
    %12 = vsyncpa %s11, 0
    loop: start=0, step=1, limit=6
    $region2: #{tpu_custom_call.1} parent=1 // loop_pre_header
      _
    $region3: #{tpu_custom_call.1} parent=1 // loop_header
      %s14 = sphi 0, %s18
      %p15 = scmp.ge.s32.totalorder %s14, 6
      %s21 = sphi 0, %s33
      %s22 = sphi 0, %s29
      %s23 = sphi 0, %s21
      %s24 = sphi 0, %s22
      %s25 = sphi 0, %s23
      %s26 = sphi 0, %s24
      %s36 = sphi 0, %s38
      %s39 = sphi 0, %s36
      %s40 = sphi 0, %s39
      %s56 = sphi 0, %s40
      %s60 = sphi 0, %s60
      %s62 = sphi 0, %s60
      %s63 = sphi 0, %s62
      %s77 = sphi 0, %s63
      %s81 = sphi 0, %s81
      %s83 = sphi 0, %s81
      %s84 = sphi 0, %s83
      %s98 = sphi 0, %s84
      %s102 = sphi 0, %s102
      %s104 = sphi 0, %s102
      %s105 = sphi 0, %s104
      %s119 = sphi 0, %s105
      %s123 = sphi 0, %s123
      %s125 = sphi 0, %s123
      %s126 = sphi 0, %s125
      %s140 = sphi 0, %s126
      %s148 = sphi 0, %s150
      %s151 = sphi 0, %s148
      %s152 = sphi 0, %s151
      %s168 = sphi 0, %s152
    $region4: #{tpu_custom_call.1} parent=1 // loop_header_branch
      %17 = sbr.rel (%p15) target = $region8
    $region5: #{tpu_custom_call.1} parent=1 // loop_body
      %s19 = ssub.s32 %s14, 1
      %s20 = ssub.s32 %s14, 2
      %s27 = sadd.s32 1, %s22
      %p28 = scmp.ge.s32.totalorder %s27, 2
      %s29 = scalar_select %p28, 0, %s27
      %s30 = sadd.s32 1, %s21
      %s31 = scalar_select %p28, %s30, %s21
      %p32 = scmp.ge.s32.totalorder %s31, 2
      %s33 = scalar_select %p32, 0, %s31
      %s34 = ssub.s32 %s21, %s33
      %p35 = scmp.eq.s32.totalorder %s34, 0
      %s37 = sadd.s32 %s36, 1
      %s38 = scalar_select %p35, %s36, %s37
      %p41 = pneg %p35
      %p42 = scmp.eq.s32.totalorder %s14, 3
      %p43 = por %p41, %p42
      %p44 = scmp.ne.s32.totalorder %s36, %s39
      %p45 = scmp.eq.s32.totalorder %s14, 0
      %p46 = por %p44, %p45
      %p47 = scmp.ne.s32.totalorder %s36, %s39
      %p48 = scmp.eq.s32.totalorder %s19, 3
      %p49 = por %p47, %p48
      %p50 = scmp.ne.s32.totalorder %s39, %s40
      %p51 = scmp.eq.s32.totalorder %s19, 0
      %p52 = por %p50, %p51
      %p53 = scmp.ne.s32.totalorder %s39, %s40
      %p54 = scmp.eq.s32.totalorder %s20, 3
      %p55 = por %p53, %p54
      %p57 = scmp.ne.s32.totalorder %s40, %s56
      %p58 = scmp.eq.s32.totalorder %s20, 0
      %p59 = por %p57, %p58
      %s61 = sadd.s32 %s60, 1
      %p64 = scmp.eq.s32.totalorder %s14, 3
      %p65 = scmp.ne.s32.totalorder %s60, %s62
      %p66 = scmp.eq.s32.totalorder %s14, 0
      %p67 = por %p65, %p66
      %p68 = scmp.ne.s32.totalorder %s60, %s62
      %p69 = scmp.eq.s32.totalorder %s19, 3
      %p70 = por %p68, %p69
      %p71 = scmp.ne.s32.totalorder %s62, %s63
      %p72 = scmp.eq.s32.totalorder %s19, 0
      %p73 = por %p71, %p72
      %p74 = scmp.ne.s32.totalorder %s62, %s63
      %p75 = scmp.eq.s32.totalorder %s20, 3
      %p76 = por %p74, %p75
      %p78 = scmp.ne.s32.totalorder %s63, %s77
      %p79 = scmp.eq.s32.totalorder %s20, 0
      %p80 = por %p78, %p79
      %s82 = sadd.s32 %s81, 1
      %p85 = scmp.eq.s32.totalorder %s14, 3
      %p86 = scmp.ne.s32.totalorder %s81, %s83
      %p87 = scmp.eq.s32.totalorder %s14, 0
      %p88 = por %p86, %p87
      %p89 = scmp.ne.s32.totalorder %s81, %s83
      %p90 = scmp.eq.s32.totalorder %s19, 3
      %p91 = por %p89, %p90
      %p92 = scmp.ne.s32.totalorder %s83, %s84
      %p93 = scmp.eq.s32.totalorder %s19, 0
      %p94 = por %p92, %p93
      %p95 = scmp.ne.s32.totalorder %s83, %s84
      %p96 = scmp.eq.s32.totalorder %s20, 3
      %p97 = por %p95, %p96
      %p99 = scmp.ne.s32.totalorder %s84, %s98
      %p100 = scmp.eq.s32.totalorder %s20, 0
      %p101 = por %p99, %p100
      %s103 = sadd.s32 %s102, 1
      %p106 = scmp.eq.s32.totalorder %s14, 3
      %p107 = scmp.ne.s32.totalorder %s102, %s104
      %p108 = scmp.eq.s32.totalorder %s14, 0
      %p109 = por %p107, %p108
      %p110 = scmp.ne.s32.totalorder %s102, %s104
      %p111 = scmp.eq.s32.totalorder %s19, 3
      %p112 = por %p110, %p111
      %p113 = scmp.ne.s32.totalorder %s104, %s105
      %p114 = scmp.eq.s32.totalorder %s19, 0
      %p115 = por %p113, %p114
      %p116 = scmp.ne.s32.totalorder %s104, %s105
      %p117 = scmp.eq.s32.totalorder %s20, 3
      %p118 = por %p116, %p117
      %p120 = scmp.ne.s32.totalorder %s105, %s119
      %p121 = scmp.eq.s32.totalorder %s20, 0
      %p122 = por %p120, %p121
      %s124 = sadd.s32 %s123, 1
      %p127 = scmp.eq.s32.totalorder %s14, 3
      %p128 = scmp.ne.s32.totalorder %s123, %s125
      %p129 = scmp.eq.s32.totalorder %s14, 0
      %p130 = por %p128, %p129
      %p131 = scmp.ne.s32.totalorder %s123, %s125
      %p132 = scmp.eq.s32.totalorder %s19, 3
      %p133 = por %p131, %p132
      %p134 = scmp.ne.s32.totalorder %s125, %s126
      %p135 = scmp.eq.s32.totalorder %s19, 0
      %p136 = por %p134, %p135
      %p137 = scmp.ne.s32.totalorder %s125, %s126
      %p138 = scmp.eq.s32.totalorder %s20, 3
      %p139 = por %p137, %p138
      %p141 = scmp.ne.s32.totalorder %s126, %s140
      %p142 = scmp.eq.s32.totalorder %s20, 0
      %p143 = por %p141, %p142
      %s144 = ssub.s32 %s21, %s33
      %s145 = ssub.s32 %s22, %s29
      %s146 = sor.u32 %s144, %s145
      %p147 = scmp.eq.s32.totalorder %s146, 0
      %s149 = sadd.s32 %s148, 1
      %s150 = scalar_select %p147, %s148, %s149
      %p153 = pneg %p147
      %p154 = scmp.eq.s32.totalorder %s14, 3
      %p155 = por %p153, %p154
      %p156 = scmp.ne.s32.totalorder %s148, %s151
      %p157 = scmp.eq.s32.totalorder %s14, 0
      %p158 = por %p156, %p157
      %p159 = scmp.ne.s32.totalorder %s148, %s151
      %p160 = scmp.eq.s32.totalorder %s19, 3
      %p161 = por %p159, %p160
      %p162 = scmp.ne.s32.totalorder %s151, %s152
      %p163 = scmp.eq.s32.totalorder %s19, 0
      %p164 = por %p162, %p163
      %p165 = scmp.ne.s32.totalorder %s151, %s152
      %p166 = scmp.eq.s32.totalorder %s20, 3
      %p167 = por %p165, %p166
      %p169 = scmp.ne.s32.totalorder %s152, %s168
      %p170 = scmp.eq.s32.totalorder %s20, 0
      %p171 = por %p169, %p170
      %p172 = scmp.le.s32.totalorder 1, %s14
      %p173 = scmp.lt.s32.totalorder %s14, 5
      %p174 = pnand %p172, %p173
      %p175 = pneg %p174
      // Predicated region
      $region9: #{tpu_custom_call.1} parent=5 // pred_check
        _
      $region10: #{tpu_custom_call.1} parent=5 // pred_check_branch
        %177 = sbr.rel (%p174) target = $region12
      $region11: #{tpu_custom_call.1} parent=5 // pred_region
        %s178 = ssub.s32 %s14, 1
        // Predicated region
        $region13: #{tpu_custom_call.1} parent=11 // pred_check
          %p179 = pneg %p73
        $region14: #{tpu_custom_call.1} parent=11 // pred_check_branch
          %181 = sbr.rel (%p179) target = $region16
        $region15: #{tpu_custom_call.1} parent=11 // pred_region
          _
        $region16: #{tpu_custom_call.1} parent=11 // pred_fallthru
          _
        // Predicated region
        $region17: #{tpu_custom_call.1} parent=11 // pred_check
          %p182 = pneg %p94
        $region18: #{tpu_custom_call.1} parent=11 // pred_check_branch
          %184 = sbr.rel (%p182) target = $region20
        $region19: #{tpu_custom_call.1} parent=11 // pred_region
          _
        $region20: #{tpu_custom_call.1} parent=11 // pred_fallthru
          _
        // Predicated region
        $region21: #{tpu_custom_call.1} parent=11 // pred_check
          %p185 = pneg %p115
        $region22: #{tpu_custom_call.1} parent=11 // pred_check_branch
          %187 = sbr.rel (%p185) target = $region24
        $region23: #{tpu_custom_call.1} parent=11 // pred_region
          _
        $region24: #{tpu_custom_call.1} parent=11 // pred_fallthru
          _
        // Predicated region
        $region25: #{tpu_custom_call.1} parent=11 // pred_check
          %p188 = pneg %p136
        $region26: #{tpu_custom_call.1} parent=11 // pred_check_branch
          %190 = sbr.rel (%p188) target = $region28
        $region27: #{tpu_custom_call.1} parent=11 // pred_region
          _
        $region28: #{tpu_custom_call.1} parent=11 // pred_fallthru
          _
      $region12: #{tpu_custom_call.1} parent=5 // pred_fallthru
        _
      %p191 = scmp.lt.s32.totalorder %s14, 4
      // Predicated region
      $region29: #{tpu_custom_call.1} parent=5 // pred_check
        %p192 = pneg %p191
      $region30: #{tpu_custom_call.1} parent=5 // pred_check_branch
        %194 = sbr.rel (%p192) target = $region32
      $region31: #{tpu_custom_call.1} parent=5 // pred_region
        // Predicated region
        $region33: #{tpu_custom_call.1} parent=31 // pred_check
          %p195 = pneg %p46
        $region34: #{tpu_custom_call.1} parent=31 // pred_check_branch
          %197 = sbr.rel (%p195) target = $region36
        $region35: #{tpu_custom_call.1} parent=31 // pred_region
          %p198 = scmp.lt.s32.totalorder %s21, 1
          %s199 = scalar_select %p198, %s21, 1
          %s200 = smul.addr %s199, 3
          %s201 = smul.addr %s200, 8
          %s202 = scalar_lea.vmem %s0, %s201
        $region36: #{tpu_custom_call.1} parent=31 // pred_fallthru
          _
      $region32: #{tpu_custom_call.1} parent=5 // pred_fallthru
        _
      %p203 = scmp.le.s32.totalorder 1, %s14
      %p204 = scmp.lt.s32.totalorder %s14, 5
      %p205 = pnand %p203, %p204
      %p206 = pneg %p205
      // Predicated region
      $region37: #{tpu_custom_call.1} parent=5 // pred_check
        _
      $region38: #{tpu_custom_call.1} parent=5 // pred_check_branch
        %208 = sbr.rel (%p205) target = $region40
      $region39: #{tpu_custom_call.1} parent=5 // pred_region
        %s209 = ssub.s32 %s14, 1
        %p210 = scmp.lt.s32.totalorder %s23, 1
        %s211 = scalar_select %p210, %s23, 1
        %s212 = smul.addr %s211, 3
        %s213 = smul.addr %s212, 8
        %s214 = scalar_lea.vmem %s0, %s213
        %p215 = pneg %p52
        %p216 = pneg %p49
        %p217 = pneg %p73
        %p218 = pneg %p70
        %p219 = pneg %p94
        %p220 = pneg %p91
        %p221 = pneg %p115
        %p222 = pneg %p112
        %p223 = pneg %p136
        %p224 = pneg %p133
        %p225 = pneg %p164
        %p226 = pneg %p161
        %s227 = sand.u32 %s151, 1
        %s228 = scalar_lea.sflag [#allocation3], %s227
        %s229 = sand.u32 %s151, 1
        %s230 = smul.addr %s229, 8
        %s231 = scalar_lea.vmem [#allocation2], %s230
        %p232 = scmp.lt.s32.totalorder %s23, 1
        %s233 = scalar_select %p232, %s23, 1
        %s234 = smul.addr %s233, 3
        %s235 = smul.addr %s234, 8
        %s236 = scalar_lea.vmem %s0, %s235
        %s237 = smul.u32 %s24, 8
        %s238 = scalar_lea.vmem %s236, %s237
        %v239 = vld [vmem:[%s238] sm:$0xff]
        %v240 = vlaneseq
        %v241 = vshrl.u32 %v240, 7
        %v242 = vsub.s32 0, %v241
        %v243 = vrot.slane %v239, %v242
        %245 = vbcast.lane.b32.xlu0 %v243, 256
        %v246 = vpop.permute.xlu0 %245
        %v247 = vlaneseq
        %v248 = vshrl.u32 %v247, 7
        %v249 = vsub.s32 1, %v248
        %v250 = vrot.slane %v239, %v249
        %252 = vbcast.lane.b32.xlu0 %v250, 256
        %v253 = vpop.permute.xlu0 %252
        %v254 = vlaneseq
        %v255 = vshrl.u32 %v254, 7
        %v256 = vsub.s32 2, %v255
        %v257 = vrot.slane %v239, %v256
        %259 = vbcast.lane.b32.xlu0 %v257, 256
        %v260 = vpop.permute.xlu0 %259
        %v261 = vlaneseq
        %v262 = vshrl.u32 %v261, 7
        %v263 = vsub.s32 3, %v262
        %v264 = vrot.slane %v239, %v263
        %266 = vbcast.lane.b32.xlu0 %v264, 256
        %v267 = vpop.permute.xlu0 %266
        %v268 = vlaneseq
        %v269 = vshrl.u32 %v268, 7
        %v270 = vsub.s32 4, %v269
        %v271 = vrot.slane %v239, %v270
        %273 = vbcast.lane.b32.xlu0 %v271, 256
        %v274 = vpop.permute.xlu0 %273
        %v275 = vlaneseq
        %v276 = vshrl.u32 %v275, 7
        %v277 = vsub.s32 5, %v276
        %v278 = vrot.slane %v239, %v277
        %280 = vbcast.lane.b32.xlu0 %v278, 256
        %v281 = vpop.permute.xlu0 %280
        %v282 = vlaneseq
        %v283 = vshrl.u32 %v282, 7
        %v284 = vsub.s32 6, %v283
        %v285 = vrot.slane %v239, %v284
        %287 = vbcast.lane.b32.xlu0 %v285, 256
        %v288 = vpop.permute.xlu0 %287
        %v289 = vlaneseq
        %v290 = vshrl.u32 %v289, 7
        %v291 = vsub.s32 7, %v290
        %v292 = vrot.slane %v239, %v291
        %294 = vbcast.lane.b32.xlu0 %v292, 256
        %v295 = vpop.permute.xlu0 %294
        %v296 = vld [vmem:[%s1] sm:$0x1]
        %v297 = vlaneseq
        %v298 = vshrl.u32 %v297, 7
        %v299 = vsub.s32 0, %v298
        %v300 = vrot.slane %v296, %v299
        %v301 = vmul.f32 %v246, %v300
        %v302 = vmul.f32 %v253, %v300
        %v303 = vmul.f32 %v260, %v300
        %v304 = vmul.f32 %v267, %v300
        %v305 = vmul.f32 %v274, %v300
        %v306 = vmul.f32 %v281, %v300
        %v307 = vmul.f32 %v288, %v300
        %v308 = vmul.f32 %v295, %v300
        %v309 = vadd.f32 %v301, 0.0
        %v310 = vadd.f32 %v302, 0.0
        %v311 = vadd.f32 %v303, 0.0
        %v312 = vadd.f32 %v304, 0.0
        %v313 = vadd.f32 %v305, 0.0
        %v314 = vadd.f32 %v306, 0.0
        %v315 = vadd.f32 %v307, 0.0
        %v316 = vadd.f32 %v308, 0.0
        %s317 = sadd.s32 %s237, 1
        %s318 = scalar_lea.vmem %s236, %s317
        %v319 = vld [vmem:[%s318] sm:$0xff]
        %v320 = vlaneseq
        %v321 = vshrl.u32 %v320, 7
        %v322 = vsub.s32 0, %v321
        %v323 = vrot.slane %v319, %v322
        %325 = vbcast.lane.b32.xlu0 %v323, 256
        %v326 = vpop.permute.xlu0 %325
        %v327 = vlaneseq
        %v328 = vshrl.u32 %v327, 7
        %v329 = vsub.s32 1, %v328
        %v330 = vrot.slane %v319, %v329
        %332 = vbcast.lane.b32.xlu0 %v330, 256
        %v333 = vpop.permute.xlu0 %332
        %v334 = vlaneseq
        %v335 = vshrl.u32 %v334, 7
        %v336 = vsub.s32 2, %v335
        %v337 = vrot.slane %v319, %v336
        %339 = vbcast.lane.b32.xlu0 %v337, 256
        %v340 = vpop.permute.xlu0 %339
        %v341 = vlaneseq
        %v342 = vshrl.u32 %v341, 7
        %v343 = vsub.s32 3, %v342
        %v344 = vrot.slane %v319, %v343
        %346 = vbcast.lane.b32.xlu0 %v344, 256
        %v347 = vpop.permute.xlu0 %346
        %v348 = vlaneseq
        %v349 = vshrl.u32 %v348, 7
        %v350 = vsub.s32 4, %v349
        %v351 = vrot.slane %v319, %v350
        %353 = vbcast.lane.b32.xlu0 %v351, 256
        %v354 = vpop.permute.xlu0 %353
        %v355 = vlaneseq
        %v356 = vshrl.u32 %v355, 7
        %v357 = vsub.s32 5, %v356
        %v358 = vrot.slane %v319, %v357
        %360 = vbcast.lane.b32.xlu0 %v358, 256
        %v361 = vpop.permute.xlu0 %360
        %v362 = vlaneseq
        %v363 = vshrl.u32 %v362, 7
        %v364 = vsub.s32 6, %v363
        %v365 = vrot.slane %v319, %v364
        %367 = vbcast.lane.b32.xlu0 %v365, 256
        %v368 = vpop.permute.xlu0 %367
        %v369 = vlaneseq
        %v370 = vshrl.u32 %v369, 7
        %v371 = vsub.s32 7, %v370
        %v372 = vrot.slane %v319, %v371
        %374 = vbcast.lane.b32.xlu0 %v372, 256
        %v375 = vpop.permute.xlu0 %374
        %v376 = vld [vmem:[%s1 + $0x1] sm:$0x1]
        %v377 = vlaneseq
        %v378 = vshrl.u32 %v377, 7
        %v379 = vsub.s32 0, %v378
        %v380 = vrot.slane %v376, %v379
        %v381 = vmul.f32 %v326, %v380
        %v382 = vmul.f32 %v333, %v380
        %v383 = vmul.f32 %v340, %v380
        %v384 = vmul.f32 %v347, %v380
        %v385 = vmul.f32 %v354, %v380
        %v386 = vmul.f32 %v361, %v380
        %v387 = vmul.f32 %v368, %v380
        %v388 = vmul.f32 %v375, %v380
        %v389 = vadd.f32 %v309, %v381
        %v390 = vadd.f32 %v310, %v382
        %v391 = vadd.f32 %v311, %v383
        %v392 = vadd.f32 %v312, %v384
        %v393 = vadd.f32 %v313, %v385
        %v394 = vadd.f32 %v314, %v386
        %v395 = vadd.f32 %v315, %v387
        %v396 = vadd.f32 %v316, %v388
        %s397 = sadd.s32 %s237, 2
        %s398 = scalar_lea.vmem %s236, %s397
        %v399 = vld [vmem:[%s398] sm:$0xff]
        %v400 = vlaneseq
        %v401 = vshrl.u32 %v400, 7
        %v402 = vsub.s32 0, %v401
        %v403 = vrot.slane %v399, %v402
        %405 = vbcast.lane.b32.xlu0 %v403, 256
        %v406 = vpop.permute.xlu0 %405
        %v407 = vlaneseq
        %v408 = vshrl.u32 %v407, 7
        %v409 = vsub.s32 1, %v408
        %v410 = vrot.slane %v399, %v409
        %412 = vbcast.lane.b32.xlu0 %v410, 256
        %v413 = vpop.permute.xlu0 %412
        %v414 = vlaneseq
        %v415 = vshrl.u32 %v414, 7
        %v416 = vsub.s32 2, %v415
        %v417 = vrot.slane %v399, %v416
        %419 = vbcast.lane.b32.xlu0 %v417, 256
        %v420 = vpop.permute.xlu0 %419
        %v421 = vlaneseq
        %v422 = vshrl.u32 %v421, 7
        %v423 = vsub.s32 3, %v422
        %v424 = vrot.slane %v399, %v423
        %426 = vbcast.lane.b32.xlu0 %v424, 256
        %v427 = vpop.permute.xlu0 %426
        %v428 = vlaneseq
        %v429 = vshrl.u32 %v428, 7
        %v430 = vsub.s32 4, %v429
        %v431 = vrot.slane %v399, %v430
        %433 = vbcast.lane.b32.xlu0 %v431, 256
        %v434 = vpop.permute.xlu0 %433
        %v435 = vlaneseq
        %v436 = vshrl.u32 %v435, 7
        %v437 = vsub.s32 5, %v436
        %v438 = vrot.slane %v399, %v437
        %440 = vbcast.lane.b32.xlu0 %v438, 256
        %v441 = vpop.permute.xlu0 %440
        %v442 = vlaneseq
        %v443 = vshrl.u32 %v442, 7
        %v444 = vsub.s32 6, %v443
        %v445 = vrot.slane %v399, %v444
        %447 = vbcast.lane.b32.xlu0 %v445, 256
        %v448 = vpop.permute.xlu0 %447
        %v449 = vlaneseq
        %v450 = vshrl.u32 %v449, 7
        %v451 = vsub.s32 7, %v450
        %v452 = vrot.slane %v399, %v451
        %454 = vbcast.lane.b32.xlu0 %v452, 256
        %v455 = vpop.permute.xlu0 %454
        %v456 = vld [vmem:[%s1 + $0x2] sm:$0x1]
        %v457 = vlaneseq
        %v458 = vshrl.u32 %v457, 7
        %v459 = vsub.s32 0, %v458
        %v460 = vrot.slane %v456, %v459
        %v461 = vmul.f32 %v406, %v460
        %v462 = vmul.f32 %v413, %v460
        %v463 = vmul.f32 %v420, %v460
        %v464 = vmul.f32 %v427, %v460
        %v465 = vmul.f32 %v434, %v460
        %v466 = vmul.f32 %v441, %v460
        %v467 = vmul.f32 %v448, %v460
        %v468 = vmul.f32 %v455, %v460
        %v469 = vadd.f32 %v389, %v461
        %v470 = vadd.f32 %v390, %v462
        %v471 = vadd.f32 %v391, %v463
        %v472 = vadd.f32 %v392, %v464
        %v473 = vadd.f32 %v393, %v465
        %v474 = vadd.f32 %v394, %v466
        %v475 = vadd.f32 %v395, %v467
        %v476 = vadd.f32 %v396, %v468
        %s477 = sadd.s32 %s237, 3
        %s478 = scalar_lea.vmem %s236, %s477
        %v479 = vld [vmem:[%s478] sm:$0xff]
        %v480 = vlaneseq
        %v481 = vshrl.u32 %v480, 7
        %v482 = vsub.s32 0, %v481
        %v483 = vrot.slane %v479, %v482
        %485 = vbcast.lane.b32.xlu0 %v483, 256
        %v486 = vpop.permute.xlu0 %485
        %v487 = vlaneseq
        %v488 = vshrl.u32 %v487, 7
        %v489 = vsub.s32 1, %v488
        %v490 = vrot.slane %v479, %v489
        %492 = vbcast.lane.b32.xlu0 %v490, 256
        %v493 = vpop.permute.xlu0 %492
        %v494 = vlaneseq
        %v495 = vshrl.u32 %v494, 7
        %v496 = vsub.s32 2, %v495
        %v497 = vrot.slane %v479, %v496
        %499 = vbcast.lane.b32.xlu0 %v497, 256
        %v500 = vpop.permute.xlu0 %499
        %v501 = vlaneseq
        %v502 = vshrl.u32 %v501, 7
        %v503 = vsub.s32 3, %v502
        %v504 = vrot.slane %v479, %v503
        %506 = vbcast.lane.b32.xlu0 %v504, 256
        %v507 = vpop.permute.xlu0 %506
        %v508 = vlaneseq
        %v509 = vshrl.u32 %v508, 7
        %v510 = vsub.s32 4, %v509
        %v511 = vrot.slane %v479, %v510
        %513 = vbcast.lane.b32.xlu0 %v511, 256
        %v514 = vpop.permute.xlu0 %513
        %v515 = vlaneseq
        %v516 = vshrl.u32 %v515, 7
        %v517 = vsub.s32 5, %v516
        %v518 = vrot.slane %v479, %v517
        %520 = vbcast.lane.b32.xlu0 %v518, 256
        %v521 = vpop.permute.xlu0 %520
        %v522 = vlaneseq
        %v523 = vshrl.u32 %v522, 7
        %v524 = vsub.s32 6, %v523
        %v525 = vrot.slane %v479, %v524
        %527 = vbcast.lane.b32.xlu0 %v525, 256
        %v528 = vpop.permute.xlu0 %527
        %v529 = vlaneseq
        %v530 = vshrl.u32 %v529, 7
        %v531 = vsub.s32 7, %v530
        %v532 = vrot.slane %v479, %v531
        %534 = vbcast.lane.b32.xlu0 %v532, 256
        %v535 = vpop.permute.xlu0 %534
        %v536 = vld [vmem:[%s1 + $0x3] sm:$0x1]
        %v537 = vlaneseq
        %v538 = vshrl.u32 %v537, 7
        %v539 = vsub.s32 0, %v538
        %v540 = vrot.slane %v536, %v539
        %v541 = vmul.f32 %v486, %v540
        %v542 = vmul.f32 %v493, %v540
        %v543 = vmul.f32 %v500, %v540
        %v544 = vmul.f32 %v507, %v540
        %v545 = vmul.f32 %v514, %v540
        %v546 = vmul.f32 %v521, %v540
        %v547 = vmul.f32 %v528, %v540
        %v548 = vmul.f32 %v535, %v540
        %v549 = vadd.f32 %v469, %v541
        %v550 = vadd.f32 %v470, %v542
        %v551 = vadd.f32 %v471, %v543
        %v552 = vadd.f32 %v472, %v544
        %v553 = vadd.f32 %v473, %v545
        %v554 = vadd.f32 %v474, %v546
        %v555 = vadd.f32 %v475, %v547
        %v556 = vadd.f32 %v476, %v548
        %s557 = sadd.s32 %s237, 4
        %s558 = scalar_lea.vmem %s236, %s557
        %v559 = vld [vmem:[%s558] sm:$0xff]
        %v560 = vlaneseq
        %v561 = vshrl.u32 %v560, 7
        %v562 = vsub.s32 0, %v561
        %v563 = vrot.slane %v559, %v562
        %565 = vbcast.lane.b32.xlu0 %v563, 256
        %v566 = vpop.permute.xlu0 %565
        %v567 = vlaneseq
        %v568 = vshrl.u32 %v567, 7
        %v569 = vsub.s32 1, %v568
        %v570 = vrot.slane %v559, %v569
        %572 = vbcast.lane.b32.xlu0 %v570, 256
        %v573 = vpop.permute.xlu0 %572
        %v574 = vlaneseq
        %v575 = vshrl.u32 %v574, 7
        %v576 = vsub.s32 2, %v575
        %v577 = vrot.slane %v559, %v576
        %579 = vbcast.lane.b32.xlu0 %v577, 256
        %v580 = vpop.permute.xlu0 %579
        %v581 = vlaneseq
        %v582 = vshrl.u32 %v581, 7
        %v583 = vsub.s32 3, %v582
        %v584 = vrot.slane %v559, %v583
        %586 = vbcast.lane.b32.xlu0 %v584, 256
        %v587 = vpop.permute.xlu0 %586
        %v588 = vlaneseq
        %v589 = vshrl.u32 %v588, 7
        %v590 = vsub.s32 4, %v589
        %v591 = vrot.slane %v559, %v590
        %593 = vbcast.lane.b32.xlu0 %v591, 256
        %v594 = vpop.permute.xlu0 %593
        %v595 = vlaneseq
        %v596 = vshrl.u32 %v595, 7
        %v597 = vsub.s32 5, %v596
        %v598 = vrot.slane %v559, %v597
        %600 = vbcast.lane.b32.xlu0 %v598, 256
        %v601 = vpop.permute.xlu0 %600
        %v602 = vlaneseq
        %v603 = vshrl.u32 %v602, 7
        %v604 = vsub.s32 6, %v603
        %v605 = vrot.slane %v559, %v604
        %607 = vbcast.lane.b32.xlu0 %v605, 256
        %v608 = vpop.permute.xlu0 %607
        %v609 = vlaneseq
        %v610 = vshrl.u32 %v609, 7
        %v611 = vsub.s32 7, %v610
        %v612 = vrot.slane %v559, %v611
        %614 = vbcast.lane.b32.xlu0 %v612, 256
        %v615 = vpop.permute.xlu0 %614
        %v616 = vld [vmem:[%s1 + $0x4] sm:$0x1]
        %v617 = vlaneseq
        %v618 = vshrl.u32 %v617, 7
        %v619 = vsub.s32 0, %v618
        %v620 = vrot.slane %v616, %v619
        %v621 = vmul.f32 %v566, %v620
        %v622 = vmul.f32 %v573, %v620
        %v623 = vmul.f32 %v580, %v620
        %v624 = vmul.f32 %v587, %v620
        %v625 = vmul.f32 %v594, %v620
        %v626 = vmul.f32 %v601, %v620
        %v627 = vmul.f32 %v608, %v620
        %v628 = vmul.f32 %v615, %v620
        %v629 = vadd.f32 %v549, %v621
        %v630 = vadd.f32 %v550, %v622
        %v631 = vadd.f32 %v551, %v623
        %v632 = vadd.f32 %v552, %v624
        %v633 = vadd.f32 %v553, %v625
        %v634 = vadd.f32 %v554, %v626
        %v635 = vadd.f32 %v555, %v627
        %v636 = vadd.f32 %v556, %v628
        %v637 = vld [vmem:[%s2] sm:$0x1]
        %v639 = vlaneseq
        %v640 = vshrl.u32 %v639, 7
        %v641 = vsub.s32 0, %v640
        %v642 = vrot.slane %v637, %v641
        %v644 = vadd.f32 %v629, %v642
        %v645 = vadd.f32 %v630, %v642
        %v646 = vadd.f32 %v631, %v642
        %v647 = vadd.f32 %v632, %v642
        %v648 = vadd.f32 %v633, %v642
        %v649 = vadd.f32 %v634, %v642
        %v650 = vadd.f32 %v635, %v642
        %v651 = vadd.f32 %v636, %v642
        %v652 = vmul.f32 %v644, 0.5
        %v653 = vmul.f32 %v645, 0.5
        %v654 = vmul.f32 %v646, 0.5
        %v655 = vmul.f32 %v647, 0.5
        %v656 = vmul.f32 %v648, 0.5
        %v657 = vmul.f32 %v649, 0.5
        %v658 = vmul.f32 %v650, 0.5
        %v659 = vmul.f32 %v651, 0.5
        %v660 = vmul.f32 %v644, 0.044715
        %v661 = vmul.f32 %v645, 0.044715
        %v662 = vmul.f32 %v646, 0.044715
        %v663 = vmul.f32 %v647, 0.044715
        %v664 = vmul.f32 %v648, 0.044715
        %v665 = vmul.f32 %v649, 0.044715
        %v666 = vmul.f32 %v650, 0.044715
        %v667 = vmul.f32 %v651, 0.044715
        %v668 = vmul.f32 %v660, %v644
        %v669 = vmul.f32 %v661, %v645
        %v670 = vmul.f32 %v662, %v646
        %v671 = vmul.f32 %v663, %v647
        %v672 = vmul.f32 %v664, %v648
        %v673 = vmul.f32 %v665, %v649
        %v674 = vmul.f32 %v666, %v650
        %v675 = vmul.f32 %v667, %v651
        %v676 = vmul.f32 %v668, %v644
        %v677 = vmul.f32 %v669, %v645
        %v678 = vmul.f32 %v670, %v646
        %v679 = vmul.f32 %v671, %v647
        %v680 = vmul.f32 %v672, %v648
        %v681 = vmul.f32 %v673, %v649
        %v682 = vmul.f32 %v674, %v650
        %v683 = vmul.f32 %v675, %v651
        %v684 = vadd.f32 %v644, %v676
        %v685 = vadd.f32 %v645, %v677
        %v686 = vadd.f32 %v646, %v678
        %v687 = vadd.f32 %v647, %v679
        %v688 = vadd.f32 %v648, %v680
        %v689 = vadd.f32 %v649, %v681
        %v690 = vadd.f32 %v650, %v682
        %v691 = vadd.f32 %v651, %v683
        %v692 = vmul.f32 %v684, 0.7978846
        %v693 = vmul.f32 %v685, 0.7978846
        %v694 = vmul.f32 %v686, 0.7978846
        %v695 = vmul.f32 %v687, 0.7978846
        %v696 = vmul.f32 %v688, 0.7978846
        %v697 = vmul.f32 %v689, 0.7978846
        %v698 = vmul.f32 %v690, 0.7978846
        %v699 = vmul.f32 %v691, 0.7978846
        %v700 = vtanh.pop %v692
        %v701 = vtanh.pop %v693
        %v702 = vtanh.pop %v694
        %v703 = vtanh.pop %v695
        %v704 = vtanh.pop %v696
        %v705 = vtanh.pop %v697
        %v706 = vtanh.pop %v698
        %v707 = vtanh.pop %v699
        %v708 = vadd.f32 %v700, 1.0
        %v709 = vadd.f32 %v701, 1.0
        %v710 = vadd.f32 %v702, 1.0
        %v711 = vadd.f32 %v703, 1.0
        %v712 = vadd.f32 %v704, 1.0
        %v713 = vadd.f32 %v705, 1.0
        %v714 = vadd.f32 %v706, 1.0
        %v715 = vadd.f32 %v707, 1.0
        %v716 = vmul.f32 %v652, %v708
        %v717 = vmul.f32 %v653, %v709
        %v718 = vmul.f32 %v654, %v710
        %v719 = vmul.f32 %v655, %v711
        %v720 = vmul.f32 %v656, %v712
        %v721 = vmul.f32 %v657, %v713
        %v722 = vmul.f32 %v658, %v714
        %v723 = vmul.f32 %v659, %v715
        %v724 = vld [vmem:[%s3] sm:$0xff]
        %v725 = vld [vmem:[%s3 + $0x8] sm:$0xff]
        %v726 = vld [vmem:[%s3 + $0x10] sm:$0xff]
        %v727 = vld [vmem:[%s3 + $0x18] sm:$0xff]
        %v728 = vld [vmem:[%s3 + $0x20] sm:$0xff]
        %v729 = vld [vmem:[%s3 + $0x28] sm:$0xff]
        %v730 = vld [vmem:[%s3 + $0x30] sm:$0xff]
        %v731 = vld [vmem:[%s3 + $0x38] sm:$0xff]
        %v732 = vld [vmem:[%s3 + $0x40] sm:$0xff]
        %v733 = vld [vmem:[%s3 + $0x48] sm:$0xff]
        %v734 = vld [vmem:[%s3 + $0x50] sm:$0xff]
        %v735 = vld [vmem:[%s3 + $0x58] sm:$0xff]
        %v736 = vld [vmem:[%s3 + $0x60] sm:$0xff]
        %v737 = vld [vmem:[%s3 + $0x68] sm:$0xff]
        %v738 = vld [vmem:[%s3 + $0x70] sm:$0xff]
        %v739 = vld [vmem:[%s3 + $0x78] sm:$0xff]
        %s740 = scalar_lea.vmem %s3, 128
        %v741 = vld [vmem:[%s740] sm:$0xff]
        %v742 = vld [vmem:[%s740 + $0x8] sm:$0xff]
        %v743 = vld [vmem:[%s740 + $0x10] sm:$0xff]
        %v744 = vld [vmem:[%s740 + $0x18] sm:$0xff]
        %v745 = vld [vmem:[%s740 + $0x20] sm:$0xff]
        %v746 = vld [vmem:[%s740 + $0x28] sm:$0xff]
        %v747 = vld [vmem:[%s740 + $0x30] sm:$0xff]
        %v748 = vld [vmem:[%s740 + $0x38] sm:$0xff]
        %v749 = vld [vmem:[%s740 + $0x40] sm:$0xff]
        %v750 = vld [vmem:[%s740 + $0x48] sm:$0xff]
        %v751 = vld [vmem:[%s740 + $0x50] sm:$0xff]
        %v752 = vld [vmem:[%s740 + $0x58] sm:$0xff]
        %v753 = vld [vmem:[%s740 + $0x60] sm:$0xff]
        %v754 = vld [vmem:[%s740 + $0x68] sm:$0xff]
        %v755 = vld [vmem:[%s740 + $0x70] sm:$0xff]
        %v756 = vld [vmem:[%s740 + $0x78] sm:$0xff]
        %v765 = vrot.slane %v716, 1
        %vm766 = vcmask 1041409
        %v767 = vsel %vm766, %v717, %v765
        %v768 = vrot.slane %v718, 7
        %vm769 = vcmask 1042434
        %v770 = vsel %vm769, %v768, %v767
        %v771 = vrot.slane %v719, 6
        %vm772 = vcmask 1043459
        %v773 = vsel %vm772, %v771, %v770
        %v774 = vrot.slane %v720, 5
        %vm775 = vcmask 1044484
        %v776 = vsel %vm775, %v774, %v773
        %v777 = vrot.slane %v721, 4
        %vm778 = vcmask 1045509
        %v779 = vsel %vm778, %v777, %v776
        %v780 = vrot.slane %v722, 3
        %vm781 = vcmask 1046534
        %v782 = vsel %vm781, %v780, %v779
        %v783 = vrot.slane %v723, 2
        %vm784 = vcmask 1047559
        %v785 = vsel %vm784, %v783, %v782
        %787 = vmatprep.subr.mxu0 0.0
        %788 = vmatpush1.msra.mxu0 %v741
        %789 = vmatprep.subr.mxu0 0.0
        %790 = vmatpush1.msra.mxu0 %v742
        %791 = vmatprep.subr.mxu0 0.0
        %792 = vmatpush1.msra.mxu0 %v743
        %793 = vmatprep.subr.mxu0 0.0
        %794 = vmatpush1.msra.mxu0 %v744
        %795 = vmatprep.subr.mxu0 0.0
        %796 = vmatpush1.msra.mxu0 %v745
        %797 = vmatprep.subr.mxu0 0.0
        %798 = vmatpush1.msra.mxu0 %v746
        %799 = vmatprep.subr.mxu0 0.0
        %800 = vmatpush1.msra.mxu0 %v747
        %801 = vmatprep.subr.mxu0 0.0
        %802 = vmatpush1.msra.mxu0 %v748
        %803 = vmatprep.subr.mxu0 0.0
        %804 = vmatpush1.msra.mxu0 %v749
        %805 = vmatprep.subr.mxu0 0.0
        %806 = vmatpush1.msra.mxu0 %v750
        %807 = vmatprep.subr.mxu0 0.0
        %808 = vmatpush1.msra.mxu0 %v751
        %809 = vmatprep.subr.mxu0 0.0
        %810 = vmatpush1.msra.mxu0 %v752
        %811 = vmatprep.subr.mxu0 0.0
        %812 = vmatpush1.msra.mxu0 %v753
        %813 = vmatprep.subr.mxu0 0.0
        %814 = vmatpush1.msra.mxu0 %v754
        %815 = vmatprep.subr.mxu0 0.0
        %816 = vmatpush1.msra.mxu0 %v755
        %817 = vmatprep.subr.mxu0 0.0
        %818 = vmatpush1.msra.mxu0 %v756
        %819 = vmatprep.subr.mxu0 0.0
        %820 = vmatpush1.msra.mxu0 0.0
        %821 = vmatprep.subr.mxu0 0.0
        %822 = vmatpush1.msra.mxu0 0.0
        %823 = vmatprep.subr.mxu0 0.0
        %824 = vmatpush1.msra.mxu0 0.0
        %825 = vmatprep.subr.mxu0 0.0
        %826 = vmatpush1.msra.mxu0 0.0
        %827 = vmatprep.subr.mxu0 0.0
        %828 = vmatpush1.msra.mxu0 0.0
        %829 = vmatprep.subr.mxu0 0.0
        %830 = vmatpush1.msra.mxu0 0.0
        %831 = vmatprep.subr.mxu0 0.0
        %832 = vmatpush1.msra.mxu0 0.0
        %833 = vmatprep.subr.mxu0 0.0
        %834 = vmatpush1.msra.mxu0 0.0
        %835 = vmatprep.subr.mxu0 0.0
        %836 = vmatpush1.msra.mxu0 0.0
        %837 = vmatprep.subr.mxu0 0.0
        %838 = vmatpush1.msra.mxu0 0.0
        %839 = vmatprep.subr.mxu0 0.0
        %840 = vmatpush1.msra.mxu0 0.0
        %841 = vmatprep.subr.mxu0 0.0
        %842 = vmatpush1.msra.mxu0 0.0
        %843 = vmatprep.subr.mxu0 0.0
        %844 = vmatpush1.msra.mxu0 0.0
        %845 = vmatprep.subr.mxu0 0.0
        %846 = vmatpush1.msra.mxu0 0.0
        %847 = vmatprep.subr.mxu0 0.0
        %848 = vmatpush1.msra.mxu0 0.0
        %849 = vmatprep.subr.mxu0 0.0
        %850 = vmatpush1.msra.mxu0 0.0
        %851 = vmatprep.mubr.f32.mxu0 0.0
        %852 = vmatmul.mubr.f32.gmra.mrb[0].mxu0 %v785
        %v853 = vpop.f32.mrb[0].mxu0
        %v854 = vadd.f32 0.0, %v853
        %v855 = vpop.f32.mrb[0].mxu0
        %856 = vdwg.mxu0
        %v857 = vrot.slane %v717, 7
        %v858 = vsel %vm766, %v857, %v716
        %v859 = vrot.slane %v718, 6
        %v860 = vsel %vm769, %v859, %v858
        %v861 = vrot.slane %v719, 5
        %v862 = vsel %vm772, %v861, %v860
        %v863 = vrot.slane %v720, 4
        %v864 = vsel %vm775, %v863, %v862
        %v865 = vrot.slane %v721, 3
        %v866 = vsel %vm778, %v865, %v864
        %v867 = vrot.slane %v722, 2
        %v868 = vsel %vm781, %v867, %v866
        %v869 = vrot.slane %v723, 1
        %v870 = vsel %vm784, %v869, %v868
        %872 = vmatprep.subr.mxu0 0.0
        %873 = vmatpush1.msra.mxu0 %v724
        %874 = vmatprep.subr.mxu0 0.0
        %875 = vmatpush1.msra.mxu0 %v725
        %876 = vmatprep.subr.mxu0 0.0
        %877 = vmatpush1.msra.mxu0 %v726
        %878 = vmatprep.subr.mxu0 0.0
        %879 = vmatpush1.msra.mxu0 %v727
        %880 = vmatprep.subr.mxu0 0.0
        %881 = vmatpush1.msra.mxu0 %v728
        %882 = vmatprep.subr.mxu0 0.0
        %883 = vmatpush1.msra.mxu0 %v729
        %884 = vmatprep.subr.mxu0 0.0
        %885 = vmatpush1.msra.mxu0 %v730
        %886 = vmatprep.subr.mxu0 0.0
        %887 = vmatpush1.msra.mxu0 %v731
        %888 = vmatprep.subr.mxu0 0.0
        %889 = vmatpush1.msra.mxu0 %v732
        %890 = vmatprep.subr.mxu0 0.0
        %891 = vmatpush1.msra.mxu0 %v733
        %892 = vmatprep.subr.mxu0 0.0
        %893 = vmatpush1.msra.mxu0 %v734
        %894 = vmatprep.subr.mxu0 0.0
        %895 = vmatpush1.msra.mxu0 %v735
        %896 = vmatprep.subr.mxu0 0.0
        %897 = vmatpush1.msra.mxu0 %v736
        %898 = vmatprep.subr.mxu0 0.0
        %899 = vmatpush1.msra.mxu0 %v737
        %900 = vmatprep.subr.mxu0 0.0
        %901 = vmatpush1.msra.mxu0 %v738
        %902 = vmatprep.subr.mxu0 0.0
        %903 = vmatpush1.msra.mxu0 %v739
        %904 = vmatprep.subr.mxu0 0.0
        %905 = vmatpush1.msra.mxu0 0.0
        %906 = vmatprep.subr.mxu0 0.0
        %907 = vmatpush1.msra.mxu0 0.0
        %908 = vmatprep.subr.mxu0 0.0
        %909 = vmatpush1.msra.mxu0 0.0
        %910 = vmatprep.subr.mxu0 0.0
        %911 = vmatpush1.msra.mxu0 0.0
        %912 = vmatprep.subr.mxu0 0.0
        %913 = vmatpush1.msra.mxu0 0.0
        %914 = vmatprep.subr.mxu0 0.0
        %915 = vmatpush1.msra.mxu0 0.0
        %916 = vmatprep.subr.mxu0 0.0
        %917 = vmatpush1.msra.mxu0 0.0
        %918 = vmatprep.subr.mxu0 0.0
        %919 = vmatpush1.msra.mxu0 0.0
        %920 = vmatprep.subr.mxu0 0.0
        %921 = vmatpush1.msra.mxu0 0.0
        %922 = vmatprep.subr.mxu0 0.0
        %923 = vmatpush1.msra.mxu0 0.0
        %924 = vmatprep.subr.mxu0 0.0
        %925 = vmatpush1.msra.mxu0 0.0
        %926 = vmatprep.subr.mxu0 0.0
        %927 = vmatpush1.msra.mxu0 0.0
        %928 = vmatprep.subr.mxu0 0.0
        %929 = vmatpush1.msra.mxu0 0.0
        %930 = vmatprep.subr.mxu0 0.0
        %931 = vmatpush1.msra.mxu0 0.0
        %932 = vmatprep.subr.mxu0 0.0
        %933 = vmatpush1.msra.mxu0 0.0
        %934 = vmatprep.subr.mxu0 0.0
        %935 = vmatpush1.msra.mxu0 0.0
        %936 = vmatprep.mubr.f32.mxu0 0.0
        %937 = vmatmul.mubr.f32.gmra.mrb[0].mxu0 %v870
        %v938 = vpop.f32.mrb[0].mxu0
        %v939 = vadd.f32 %v854, %v938
        %v940 = vpop.f32.mrb[0].mxu0
        %941 = vdwg.mxu0
        %s942 = scalar_lea.vmem %s3, 256
        %v943 = vld [vmem:[%s942] sm:$0xff]
        %v944 = vld [vmem:[%s942 + $0x8] sm:$0xff]
        %v945 = vld [vmem:[%s942 + $0x10] sm:$0xff]
        %v946 = vld [vmem:[%s942 + $0x18] sm:$0xff]
        %v947 = vld [vmem:[%s942 + $0x20] sm:$0xff]
        %v948 = vld [vmem:[%s942 + $0x28] sm:$0xff]
        %v949 = vld [vmem:[%s942 + $0x30] sm:$0xff]
        %v950 = vld [vmem:[%s942 + $0x38] sm:$0xff]
        %v951 = vld [vmem:[%s942 + $0x40] sm:$0xff]
        %v952 = vld [vmem:[%s942 + $0x48] sm:$0xff]
        %v953 = vld [vmem:[%s942 + $0x50] sm:$0xff]
        %v954 = vld [vmem:[%s942 + $0x58] sm:$0xff]
        %v955 = vld [vmem:[%s942 + $0x60] sm:$0xff]
        %v956 = vld [vmem:[%s942 + $0x68] sm:$0xff]
        %v957 = vld [vmem:[%s942 + $0x70] sm:$0xff]
        %v958 = vld [vmem:[%s942 + $0x78] sm:$0xff]
        %v959 = vrot.slane %v716, 2
        %v960 = vrot.slane %v717, 1
        %v961 = vsel %vm766, %v960, %v959
        %v962 = vsel %vm769, %v718, %v961
        %v963 = vrot.slane %v719, 7
        %v964 = vsel %vm772, %v963, %v962
        %v965 = vrot.slane %v720, 6
        %v966 = vsel %vm775, %v965, %v964
        %v967 = vrot.slane %v721, 5
        %v968 = vsel %vm778, %v967, %v966
        %v969 = vrot.slane %v722, 4
        %v970 = vsel %vm781, %v969, %v968
        %v971 = vrot.slane %v723, 3
        %v972 = vsel %vm784, %v971, %v970
        %974 = vmatprep.subr.mxu0 0.0
        %975 = vmatpush1.msra.mxu0 %v943
        %976 = vmatprep.subr.mxu0 0.0
        %977 = vmatpush1.msra.mxu0 %v944
        %978 = vmatprep.subr.mxu0 0.0
        %979 = vmatpush1.msra.mxu0 %v945
        %980 = vmatprep.subr.mxu0 0.0
        %981 = vmatpush1.msra.mxu0 %v946
        %982 = vmatprep.subr.mxu0 0.0
        %983 = vmatpush1.msra.mxu0 %v947
        %984 = vmatprep.subr.mxu0 0.0
        %985 = vmatpush1.msra.mxu0 %v948
        %986 = vmatprep.subr.mxu0 0.0
        %987 = vmatpush1.msra.mxu0 %v949
        %988 = vmatprep.subr.mxu0 0.0
        %989 = vmatpush1.msra.mxu0 %v950
        %990 = vmatprep.subr.mxu0 0.0
        %991 = vmatpush1.msra.mxu0 %v951
        %992 = vmatprep.subr.mxu0 0.0
        %993 = vmatpush1.msra.mxu0 %v952
        %994 = vmatprep.subr.mxu0 0.0
        %995 = vmatpush1.msra.mxu0 %v953
        %996 = vmatprep.subr.mxu0 0.0
        %997 = vmatpush1.msra.mxu0 %v954
        %998 = vmatprep.subr.mxu0 0.0
        %999 = vmatpush1.msra.mxu0 %v955
        %1000 = vmatprep.subr.mxu0 0.0
        %1001 = vmatpush1.msra.mxu0 %v956
        %1002 = vmatprep.subr.mxu0 0.0
        %1003 = vmatpush1.msra.mxu0 %v957
        %1004 = vmatprep.subr.mxu0 0.0
        %1005 = vmatpush1.msra.mxu0 %v958
        %1006 = vmatprep.subr.mxu0 0.0
        %1007 = vmatpush1.msra.mxu0 0.0
        %1008 = vmatprep.subr.mxu0 0.0
        %1009 = vmatpush1.msra.mxu0 0.0
        %1010 = vmatprep.subr.mxu0 0.0
        %1011 = vmatpush1.msra.mxu0 0.0
        %1012 = vmatprep.subr.mxu0 0.0
        %1013 = vmatpush1.msra.mxu0 0.0
        %1014 = vmatprep.subr.mxu0 0.0
        %1015 = vmatpush1.msra.mxu0 0.0
        %1016 = vmatprep.subr.mxu0 0.0
        %1017 = vmatpush1.msra.mxu0 0.0
        %1018 = vmatprep.subr.mxu0 0.0
        %1019 = vmatpush1.msra.mxu0 0.0
        %1020 = vmatprep.subr.mxu0 0.0
        %1021 = vmatpush1.msra.mxu0 0.0
        %1022 = vmatprep.subr.mxu0 0.0
        %1023 = vmatpush1.msra.mxu0 0.0
        %1024 = vmatprep.subr.mxu0 0.0
        %1025 = vmatpush1.msra.mxu0 0.0
        %1026 = vmatprep.subr.mxu0 0.0
        %1027 = vmatpush1.msra.mxu0 0.0
        %1028 = vmatprep.subr.mxu0 0.0
        %1029 = vmatpush1.msra.mxu0 0.0
        %1030 = vmatprep.subr.mxu0 0.0
        %1031 = vmatpush1.msra.mxu0 0.0
        %1032 = vmatprep.subr.mxu0 0.0
        %1033 = vmatpush1.msra.mxu0 0.0
        %1034 = vmatprep.subr.mxu0 0.0
        %1035 = vmatpush1.msra.mxu0 0.0
        %1036 = vmatprep.subr.mxu0 0.0
        %1037 = vmatpush1.msra.mxu0 0.0
        %1038 = vmatprep.mubr.f32.mxu0 0.0
        %1039 = vmatmul.mubr.f32.gmra.mrb[0].mxu0 %v972
        %v1040 = vpop.f32.mrb[0].mxu0
        %v1041 = vadd.f32 0.0, %v1040
        %v1042 = vpop.f32.mrb[0].mxu0
        %1043 = vdwg.mxu0
        %v1044 = vadd.f32 %v939, %v1041
        %s1045 = scalar_lea.vmem %s3, 384
        %v1046 = vld [vmem:[%s1045] sm:$0xff]
        %v1047 = vld [vmem:[%s1045 + $0x8] sm:$0xff]
        %v1048 = vld [vmem:[%s1045 + $0x10] sm:$0xff]
        %v1049 = vld [vmem:[%s1045 + $0x18] sm:$0xff]
        %v1050 = vld [vmem:[%s1045 + $0x20] sm:$0xff]
        %v1051 = vld [vmem:[%s1045 + $0x28] sm:$0xff]
        %v1052 = vld [vmem:[%s1045 + $0x30] sm:$0xff]
        %v1053 = vld [vmem:[%s1045 + $0x38] sm:$0xff]
        %v1054 = vld [vmem:[%s1045 + $0x40] sm:$0xff]
        %v1055 = vld [vmem:[%s1045 + $0x48] sm:$0xff]
        %v1056 = vld [vmem:[%s1045 + $0x50] sm:$0xff]
        %v1057 = vld [vmem:[%s1045 + $0x58] sm:$0xff]
        %v1058 = vld [vmem:[%s1045 + $0x60] sm:$0xff]
        %v1059 = vld [vmem:[%s1045 + $0x68] sm:$0xff]
        %v1060 = vld [vmem:[%s1045 + $0x70] sm:$0xff]
        %v1061 = vld [vmem:[%s1045 + $0x78] sm:$0xff]
        %v1062 = vrot.slane %v716, 3
        %v1063 = vrot.slane %v717, 2
        %v1064 = vsel %vm766, %v1063, %v1062
        %v1065 = vrot.slane %v718, 1
        %v1066 = vsel %vm769, %v1065, %v1064
        %v1067 = vsel %vm772, %v719, %v1066
        %v1068 = vrot.slane %v720, 7
        %v1069 = vsel %vm775, %v1068, %v1067
        %v1070 = vrot.slane %v721, 6
        %v1071 = vsel %vm778, %v1070, %v1069
        %v1072 = vrot.slane %v722, 5
        %v1073 = vsel %vm781, %v1072, %v1071
        %v1074 = vrot.slane %v723, 4
        %v1075 = vsel %vm784, %v1074, %v1073
        %1077 = vmatprep.subr.mxu0 0.0
        %1078 = vmatpush1.msra.mxu0 %v1046
        %1079 = vmatprep.subr.mxu0 0.0
        %1080 = vmatpush1.msra.mxu0 %v1047
        %1081 = vmatprep.subr.mxu0 0.0
        %1082 = vmatpush1.msra.mxu0 %v1048
        %1083 = vmatprep.subr.mxu0 0.0
        %1084 = vmatpush1.msra.mxu0 %v1049
        %1085 = vmatprep.subr.mxu0 0.0
        %1086 = vmatpush1.msra.mxu0 %v1050
        %1087 = vmatprep.subr.mxu0 0.0
        %1088 = vmatpush1.msra.mxu0 %v1051
        %1089 = vmatprep.subr.mxu0 0.0
        %1090 = vmatpush1.msra.mxu0 %v1052
        %1091 = vmatprep.subr.mxu0 0.0
        %1092 = vmatpush1.msra.mxu0 %v1053
        %1093 = vmatprep.subr.mxu0 0.0
        %1094 = vmatpush1.msra.mxu0 %v1054
        %1095 = vmatprep.subr.mxu0 0.0
        %1096 = vmatpush1.msra.mxu0 %v1055
        %1097 = vmatprep.subr.mxu0 0.0
        %1098 = vmatpush1.msra.mxu0 %v1056
        %1099 = vmatprep.subr.mxu0 0.0
        %1100 = vmatpush1.msra.mxu0 %v1057
        %1101 = vmatprep.subr.mxu0 0.0
        %1102 = vmatpush1.msra.mxu0 %v1058
        %1103 = vmatprep.subr.mxu0 0.0
        %1104 = vmatpush1.msra.mxu0 %v1059
        %1105 = vmatprep.subr.mxu0 0.0
        %1106 = vmatpush1.msra.mxu0 %v1060
        %1107 = vmatprep.subr.mxu0 0.0
        %1108 = vmatpush1.msra.mxu0 %v1061
        %1109 = vmatprep.subr.mxu0 0.0
        %1110 = vmatpush1.msra.mxu0 0.0
        %1111 = vmatprep.subr.mxu0 0.0
        %1112 = vmatpush1.msra.mxu0 0.0
        %1113 = vmatprep.subr.mxu0 0.0
        %1114 = vmatpush1.msra.mxu0 0.0
        %1115 = vmatprep.subr.mxu0 0.0
        %1116 = vmatpush1.msra.mxu0 0.0
        %1117 = vmatprep.subr.mxu0 0.0
        %1118 = vmatpush1.msra.mxu0 0.0
        %1119 = vmatprep.subr.mxu0 0.0
        %1120 = vmatpush1.msra.mxu0 0.0
        %1121 = vmatprep.subr.mxu0 0.0
        %1122 = vmatpush1.msra.mxu0 0.0
        %1123 = vmatprep.subr.mxu0 0.0
        %1124 = vmatpush1.msra.mxu0 0.0
        %1125 = vmatprep.subr.mxu0 0.0
        %1126 = vmatpush1.msra.mxu0 0.0
        %1127 = vmatprep.subr.mxu0 0.0
        %1128 = vmatpush1.msra.mxu0 0.0
        %1129 = vmatprep.subr.mxu0 0.0
        %1130 = vmatpush1.msra.mxu0 0.0
        %1131 = vmatprep.subr.mxu0 0.0
        %1132 = vmatpush1.msra.mxu0 0.0
        %1133 = vmatprep.subr.mxu0 0.0
        %1134 = vmatpush1.msra.mxu0 0.0
        %1135 = vmatprep.subr.mxu0 0.0
        %1136 = vmatpush1.msra.mxu0 0.0
        %1137 = vmatprep.subr.mxu0 0.0
        %1138 = vmatpush1.msra.mxu0 0.0
        %1139 = vmatprep.subr.mxu0 0.0
        %1140 = vmatpush1.msra.mxu0 0.0
        %1141 = vmatprep.mubr.f32.mxu0 0.0
        %1142 = vmatmul.mubr.f32.gmra.mrb[0].mxu0 %v1075
        %v1143 = vpop.f32.mrb[0].mxu0
        %v1144 = vadd.f32 0.0, %v1143
        %v1145 = vpop.f32.mrb[0].mxu0
        %1146 = vdwg.mxu0
        %v1147 = vadd.f32 %v1044, %v1144
        %v1148 = vld [vmem:[%s4] sm:$0x1]
        %v1150 = vlaneseq
        %v1151 = vshrl.u32 %v1150, 7
        %v1152 = vsub.s32 0, %v1151
        %v1153 = vrot.slane %v1148, %v1152
        %v1155 = vadd.f32 %v1147, %v1153
        %v1156 = vmul.f32 %v1155, 0.5
        %v1157 = vmul.f32 %v1155, 0.044715
        %v1158 = vmul.f32 %v1157, %v1155
        %v1159 = vmul.f32 %v1158, %v1155
        %v1160 = vadd.f32 %v1155, %v1159
        %v1161 = vmul.f32 %v1160, 0.7978846
        %v1162 = vtanh.pop %v1161
        %v1163 = vadd.f32 %v1162, 1.0
        %v1164 = vmul.f32 %v1156, %v1163
        %vm1165 = vcmask 261120
        %1166 = vst.msk [vmem:[%s231] sm:$0xff] %vm1165, %v1164
        %s1167 = sand.u32 %s151, 1
        %s1168 = scalar_lea.sflag [#allocation3], %s1167
        %s1169 = sand.u32 %s151, 1
        %s1170 = smul.addr %s1169, 8
        %s1171 = scalar_lea.vmem [#allocation2], %s1170
        // Predicated region
        $region41: #{tpu_custom_call.1} parent=39 // pred_check
          %p1172 = pneg %p161
        $region42: #{tpu_custom_call.1} parent=39 // pred_check_branch
          %1174 = sbr.rel (%p1172) target = $region44
        $region43: #{tpu_custom_call.1} parent=39 // pred_region
          %s1176 = ssub.s32 128, 128
          %1177 = vsyncadd %s1168, %s1176
          %s1178 = smul.addr %s23, 2
          %s1179 = sadd.s32 %s24, %s1178
          %s1180 = smul.addr %s1179, 128
          %s1181 = scalar_lea.hbm %s5, %s1180
          %s1183 = sshll.u32 %s1171, 4
          %s1184 = int_to_ptr.vmem [resolvable:$true] %s1183
          %1186 = dma.vmem_to_hbm [thread:$0]  %s1184, 128, %s1181, %s1168
        $region44: #{tpu_custom_call.1} parent=39 // pred_fallthru
          _
      $region40: #{tpu_custom_call.1} parent=5 // pred_fallthru
        _
      %p1187 = scmp.le.s32.totalorder 2, %s14
      // Predicated region
      $region45: #{tpu_custom_call.1} parent=5 // pred_check
        %p1188 = pneg %p1187
      $region46: #{tpu_custom_call.1} parent=5 // pred_check_branch
        %1190 = sbr.rel (%p1188) target = $region48
      $region47: #{tpu_custom_call.1} parent=5 // pred_region
        %s1191 = ssub.s32 %s14, 2
        // Predicated region
        $region49: #{tpu_custom_call.1} parent=47 // pred_check
          %p1192 = pneg %p167
        $region50: #{tpu_custom_call.1} parent=47 // pred_check_branch
          %1194 = sbr.rel (%p1192) target = $region52
        $region51: #{tpu_custom_call.1} parent=47 // pred_region
          %s1195 = sand.u32 %s152, 1
          %s1196 = scalar_lea.sflag [#allocation3], %s1195
          %s1197 = sand.u32 %s152, 1
          %s1198 = smul.addr %s1197, 8
          %s1199 = scalar_lea.vmem [#allocation2], %s1198
          %1200 = dma.done %s1196, 128
        $region52: #{tpu_custom_call.1} parent=47 // pred_fallthru
          _
      $region48: #{tpu_custom_call.1} parent=5 // pred_fallthru
        _
    $region6: #{tpu_custom_call.1} parent=1 // loop_footer
      %s18 = sadd.s32 1, %s14
    $region7: #{tpu_custom_call.1} parent=1 // loop_footer_branch
      %13 = sbr.rel target = $region3
    $region8: #{tpu_custom_call.1} parent=1 // loop_exit
      _
    %1201 = vsyncpa [#allocation3], 1
    %s1202 = scalar_lea.sflag [#allocation3], 1
    %1203 = vsyncpa %s1202, 1

</llo_original>
